<compile_context>
chip_gen: v7x
topology: tpu7x:2x2x1
jax: 0.10.0
libtpu: 0.0.40
codegen_flags: <defaults>
</compile_context>

<pallas_src>
import functools

import jax
import jax.numpy as jnp
from jax.experimental import pallas as pl
from jax.experimental.pallas import tpu as pltpu


def _add_one_kernel(x_ref, o_ref):
    # Elementwise hot path on the VPU: output = input + 1 (in the input dtype).
    o_ref[...] = x_ref[...] + jnp.array(1, dtype=o_ref.dtype)


@functools.partial(jax.jit, static_argnames=())
def my_model_forward(x):
    """JAX/Pallas equivalent of My_model.forward: returns x + 1.

    Preserves input shape and dtype. Works for 0-d scalars up to large tensors
    by flattening to a lane-dense 2-D slab and tiling over a 1-D grid.
    """
    x = jnp.asarray(x)
    dtype = x.dtype
    orig_shape = x.shape
    n = x.size  # static Python int under trace

    # Lane-dense trailing dim: multiple of 128; use 1024 when there is enough data.
    lanes = 1024 if n >= 1024 else 128

    # Rows: multiple of 8 (sublane) and of the chosen sublane tile.
    rows = -(-n // lanes)
    rows = ((rows + 7) // 8) * 8
    tm = min(512, rows)                      # <= 2 MiB per f32 buffer per tile
    rows = ((rows + tm - 1) // tm) * tm
    padded = rows * lanes

    flat = x.reshape(-1)
    if padded > n:
        flat = jnp.pad(flat, (0, padded - n))
    x2d = flat.reshape(rows, lanes)

    grid = (rows // tm,)

    out2d = pl.pallas_call(
        _add_one_kernel,
        out_shape=jax.ShapeDtypeStruct((rows, lanes), dtype),
        grid=grid,
        in_specs=[pl.BlockSpec((tm, lanes), lambda i: (i, 0))],
        out_specs=pl.BlockSpec((tm, lanes), lambda i: (i, 0)),
        input_output_aliases={0: 0},  # in-place add: halve HBM traffic
        compiler_params=pltpu.CompilerParams(
            dimension_semantics=("parallel",),
        ),
    )(x2d)

    return out2d.reshape(-1)[:n].reshape(orig_shape)


if __name__ == "__main__":
    # 1) Matches the PyTorch driver exactly: x = torch.tensor(1.0)
    x_scalar = jnp.float32(1.0)
    out_scalar = jax.block_until_ready(my_model_forward(x_scalar))
    assert out_scalar.shape == (), f"expected scalar output, got {out_scalar.shape}"
    assert out_scalar.dtype == jnp.float32
    assert jnp.allclose(out_scalar, jnp.float32(2.0)), out_scalar

    # 2) Small deterministic tensor to exercise the tiled/grid path.
    key = jax.random.PRNGKey(0)
    x_tensor = jax.random.normal(key, (2, 4, 16, 16), dtype=jnp.float32)
    out_tensor = jax.block_until_ready(my_model_forward(x_tensor))
    assert out_tensor.shape == x_tensor.shape
    assert out_tensor.dtype == x_tensor.dtype
    assert jnp.allclose(out_tensor, x_tensor + 1.0, atol=0, rtol=0), "mismatch vs reference"

    print("KERNEL_OK")
</pallas_src>

<mosaic_0001>
module attributes {stable_mosaic.version = 11 : i64} {
  func.func @_add_one_kernel(%arg0: i32, %arg1: memref<8x128xf32, #tpu.memory_space<vmem>>, %arg2: memref<8x128xf32, #tpu.memory_space<vmem>>) attributes {dimension_semantics = [#tpu.dimension_semantics<parallel>], iteration_bounds = array<i64: 1>, scalar_prefetch = 0 : i64, scratch_operands = 0 : i64, tpu.core_type = #tpu.core_type<tc>, window_params = [{transform_indices = @transform_0, window_bounds = array<i64: 8, 128>}, {transform_indices = @transform_1, window_bounds = array<i64: 8, 128>}]} {
    %c0 = arith.constant 0 : index
    %c0_0 = arith.constant 0 : index
    %0 = vector.load %arg1[%c0, %c0_0] : memref<8x128xf32, #tpu.memory_space<vmem>>, vector<8x128xf32>
    %cst = arith.constant 1.000000e+00 : f32
    %1 = vector.broadcast %cst : f32 to vector<8x128xf32>
    %2 = arith.addf %0, %1 : vector<8x128xf32>
    %c0_1 = arith.constant 0 : index
    %c0_2 = arith.constant 0 : index
    %3 = vector.load %arg2[%c0_1, %c0_2] : memref<8x128xf32, #tpu.memory_space<vmem>>, vector<8x128xf32>
    tpu.vector_store %arg2[%c0_1, %c0_2], %2 {strides = array<i32>} : memref<8x128xf32, #tpu.memory_space<vmem>>, vector<8x128xf32>,
    return
  }
  func.func @transform_0(%arg0: i32) -> (i32, i32) {
    %c0_i32 = arith.constant 0 : i32
    %c0_i32_0 = arith.constant 0 : i32
    return %arg0, %c0_i32 : i32, i32
  }
  func.func @transform_1(%arg0: i32) -> (i32, i32) {
    %c0_i32 = arith.constant 0 : i32
    %c0_i32_0 = arith.constant 0 : i32
    return %arg0, %c0_i32 : i32, i32
  }
}

</mosaic_0001>

<llo_original>
// kernel: my_model_forward.1
$region0: #{my_model_forward.1}
  #allocation0 [shape = 'u32[]', space=smem, size = 0x4, offset = 0x4, fixed_abs, tag = 'smem constant byte address 0x4 - core index']
  #allocation1 [shape = 'u32[144,128]{1,0:T(1,128)}', space=vmem, size = 0x12000, scoped, tag = 'internal scratch']
  %s0 = inlined_call_operand.vmem [shape: f32[8,128], index: 0, kind: input, shape index: {}, may-alias: {0,1}]
  %s1 = inlined_call_operand.vmem [shape: f32[8,128], index: 1, kind: output, shape index: {}, may-alias: {0,1}]
  %s2 = sld [smem:[#allocation0]]
  $region14: #{my_model_forward.1} parent=0
    _
  %s4 = ssub.s32 1, %s2
  %s5 = scalar_select 0, %s4, %s2
  // Predicated region
  $region2: #{my_model_forward.1} parent=0 // pred_check
    _
  $region3: #{my_model_forward.1} parent=0 // pred_check_branch
    %7 = sbr.rel (0) target = $region5
  $region4: #{my_model_forward.1} parent=0 // pred_region
    _
  $region5: #{my_model_forward.1} parent=0 // pred_fallthru
    _
  %v8 = vld [vmem:[%s0] sm:$0xff]
  %v9 = vadd.f32 %v8, 1.0
  %10 = vst [vmem:[%s1] sm:$0xff] %v9
  // Predicated region
  $region6: #{my_model_forward.1} parent=0 // pred_check
    _
  $region7: #{my_model_forward.1} parent=0 // pred_check_branch
    %12 = sbr.rel (0) target = $region9
  $region8: #{my_model_forward.1} parent=0 // pred_region
    _
  $region9: #{my_model_forward.1} parent=0 // pred_fallthru
    _
  // Predicated region
  $region10: #{my_model_forward.1} parent=0 // pred_check
    _
  $region11: #{my_model_forward.1} parent=0 // pred_check_branch
    %14 = sbr.rel (0) target = $region13
  $region12: #{my_model_forward.1} parent=0 // pred_region
    _
  $region13: #{my_model_forward.1} parent=0 // pred_fallthru
    _

</llo_original>
